<compile_context>
chip_gen: v6e
topology: v6e:2x2x1
jax: 0.10.0
libtpu: 0.0.40
codegen_flags: <defaults>
</compile_context>

<pallas_src>
import jax
import jax.numpy as jnp
from jax.experimental import pallas as pl
from jax.experimental.pallas import tpu as pltpu

_LANES = 128
_MAX_TILE_ROWS = 4096        # 4096 * 128 * 4 B = 2 MiB per f32 block
_MIN_GRID = 8                # target >= 8 grid steps (pipelining + both v7x cores)
_VMEM_LIMIT = 32 * 1024 * 1024
_TWO_PI = 6.283185307179586

_HAS_STATEFUL_NORMAL = hasattr(pltpu, "stateful_normal")


# ----------------------------------------------------------------------------- 
# In-kernel noise sources
# -----------------------------------------------------------------------------
def _clt_normal(shape):
    """Approx N(0,1) from the HW PRNG using only VPU ops (no EUP transcendentals).

    Sum of 12 uniform bytes (3 prng_random_bits draws, 4 bytes each):
      mean = 12 * 127.5 = 1530,  std = sqrt(12 * (2^16 - 1) / 12) ~= 255.998
    Adequate quality for noise injection; keeps the kernel memory-bound on v7x.
    """
    total = jnp.zeros(shape, dtype=jnp.float32)
    for _ in range(3):
        bits = pltpu.bitcast(pltpu.prng_random_bits(shape), jnp.uint32)
        b = ((bits & jnp.uint32(0xFF))
             + ((bits >> 8) & jnp.uint32(0xFF))
             + ((bits >> 16) & jnp.uint32(0xFF))
             + (bits >> 24))
        total = total + b.astype(jnp.float32)
    return (total - jnp.float32(1530.0)) * jnp.float32(1.0 / 255.99804686)


def _splitmix32(x):
    """32-bit avalanche mixer (splitmix32-style finaliser); x is uint32."""
    x = x + jnp.uint32(0x9E3779B9)
    x = (x ^ (x >> 16)) * jnp.uint32(0x21F0AAAD)
    x = (x ^ (x >> 15)) * jnp.uint32(0x735A2D97)
    return x ^ (x >> 15)


# -----------------------------------------------------------------------------
# Kernels
# -----------------------------------------------------------------------------
def _noise_kernel_tpu(seed_ref, params_ref, x_ref, o_ref):
    # Independent, uncorrelated PRNG stream per block -> grid axis is "parallel".
    pltpu.prng_seed(seed_ref[0], pl.program_id(0))
    std = params_ref[0]
    mean = params_ref[1]
    if _HAS_STATEFUL_NORMAL:
        z = pltpu.stateful_normal(x_ref.shape, jnp.float32)
    else:
        z = _clt_normal(x_ref.shape)
    noise = mean + std * z
    # Load native dtype, math in f32, store native dtype.
    o_ref[...] = (x_ref[...].astype(jnp.float32) + noise).astype(o_ref.dtype)


def _noise_kernel_generic(seed_ref, params_ref, x_ref, o_ref):
    # Counter-based PRNG from plain jnp ops: works under interpret mode / non-TPU
    # backends.  Block id is mixed into the seed (not the counter), so per-block
    # streams are independent and the counter never overflows within a block.
    rows, lanes = x_ref.shape
    pid = pl.program_id(0).astype(jnp.uint32)
    seed = _splitmix32(seed_ref[0].astype(jnp.uint32)
                       ^ (pid * jnp.uint32(0x9E3779B9)))
    row = jax.lax.broadcasted_iota(jnp.uint32, (rows, lanes), 0)
    col = jax.lax.broadcasted_iota(jnp.uint32, (rows, lanes), 1)
    ctr = seed + (row * jnp.uint32(lanes) + col) * jnp.uint32(2)
    b1 = _splitmix32(ctr)
    b2 = _splitmix32(ctr + jnp.uint32(1))
    inv24 = jnp.float32(1.0 / (1 << 24))
    u1 = ((b1 >> 8).astype(jnp.float32) + 1.0) * inv24      # (0, 1] -> log safe
    u2 = (b2 >> 8).astype(jnp.float32) * inv24               # [0, 1)
    z = jnp.sqrt(jnp.float32(-2.0) * jnp.log(u1)) * jnp.cos(jnp.float32(_TWO_PI) * u2)
    noise = params_ref[1] + params_ref[0] * z
    o_ref[...] = (x_ref[...].astype(jnp.float32) + noise).astype(o_ref.dtype)


# -----------------------------------------------------------------------------
# Wrapper
# -----------------------------------------------------------------------------
def gaussian_noise_variant(x, *, std, mean=0.0, seed=0, training=True,
                           interpret=False):
    """Forward pass of GaussianNoiseVariant.

    training=True : returns x + N(mean, std) noise of the same shape (regenerated
                    from `seed` each call; pass a fresh seed per call).
    training=False: returns x unchanged (PyTorch eval-mode behaviour).

    Note: the noise stream depends on the seed AND the block decomposition
    (dtype / size dependent), so identical seeds give identical noise only for
    identical shapes/dtypes — fine for noise injection.
    """
    if not training:
        return x

    orig_shape = x.shape
    orig_dtype = x.dtype
    n = int(x.size)
    itemsize = jnp.dtype(orig_dtype).itemsize

    flat = x.reshape(-1)                 # native dtype; free (bitcast) reshape
    n_main = (n // _LANES) * _LANES
    padded = n_main != n
    if padded:
        # TODO(synk): misaligned sizes (rare for NN activations) still pay one
        # small pad + slice round-trip; aligned sizes take the zero-copy path.
        flat = jnp.pad(flat, (0, _LANES - (n - n_main)))
    x2 = flat.reshape(-1, _LANES)
    rows = x2.shape[0]

    # Native sublane packing: 8 rows (f32/i32), 16 (bf16/f16), 32 (int8/fp8).
    sub = 8 * max(1, 4 // itemsize)

    # Shrink the tile so the grid has >= _MIN_GRID steps (pipelining, v7x cores),
    # but never below one packed sublane tile and never above 2 MiB f32 blocks.
    tile_rows = pl.cdiv(rows, _MIN_GRID)
    tile_rows = ((tile_rows + sub - 1) // sub) * sub
    tile_rows = max(sub, min(_MAX_TILE_ROWS, tile_rows))
    grid = (pl.cdiv(rows, tile_rows),)

    on_tpu = (not interpret) and jax.default_backend() == "tpu"
    kernel = _noise_kernel_tpu if on_tpu else _noise_kernel_generic

    seed_arr = jnp.asarray([seed], dtype=jnp.int32)
    params_arr = jnp.asarray([std, mean], dtype=jnp.float32)

    cost = pl.CostEstimate(
        flops=2 * n,
        transcendentals=0 if (on_tpu and _HAS_STATEFUL_NORMAL) else 2 * n,
        bytes_accessed=2 * n * itemsize,
    )

    out = pl.pallas_call(
        kernel,
        out_shape=jax.ShapeDtypeStruct(x2.shape, orig_dtype),
        grid=grid,
        in_specs=[
            pl.BlockSpec(memory_space=pltpu.MemorySpace.SMEM),     # seed
            pl.BlockSpec(memory_space=pltpu.MemorySpace.SMEM),     # (std, mean)
            pl.BlockSpec((tile_rows, _LANES), lambda i: (i, 0)),   # x tile
        ],
        out_specs=pl.BlockSpec((tile_rows, _LANES), lambda i: (i, 0)),
        compiler_params=pltpu.CompilerParams(
            dimension_semantics=("parallel",),
            vmem_limit_bytes=_VMEM_LIMIT),
        cost_estimate=cost,
        interpret=interpret,
    )(seed_arr, params_arr, x2)

    out = out.reshape(-1)
    if padded:
        out = out[:n]
    return out.reshape(orig_shape)


if __name__ == "__main__":
    key = jax.random.PRNGKey(0)
    # Small NCHW input consistent with the module's usage on image features.
    x = jax.random.normal(key, (2, 4, 16, 16), dtype=jnp.float32)

    std, mean = 0.3, 0.0

    y_train = gaussian_noise_variant(x, std=std, mean=mean, seed=0, training=True)
    y_eval = gaussian_noise_variant(x, std=std, mean=mean, seed=0, training=False)
    jax.block_until_ready(y_train)
    jax.block_until_ready(y_eval)

    # Sanity checks: shapes/dtype preserved, eval mode is identity, train mode
    # adds roughly zero-mean noise with roughly the requested std.
    assert y_train.shape == x.shape and y_train.dtype == x.dtype
    assert jnp.array_equal(y_eval, x)
    noise = y_train - x
    assert abs(float(jnp.mean(noise)) - mean) < 0.1
    assert abs(float(jnp.std(noise)) - std) < 0.1

    print("KERNEL_OK")
</pallas_src>

<mosaic_0001>
module attributes {stable_mosaic.version = 11 : i64} {
  func.func @_noise_kernel_generic(%arg0: i32, %arg1: memref<1xi32, #tpu.memory_space<smem>>, %arg2: memref<2xf32, #tpu.memory_space<smem>>, %arg3: memref<8x128xf32, #tpu.memory_space<vmem>>, %arg4: memref<8x128xf32, #tpu.memory_space<vmem>>) attributes {dimension_semantics = [#tpu.dimension_semantics<parallel>], iteration_bounds = array<i64: 2>, scalar_prefetch = 0 : i64, scratch_operands = 0 : i64, tpu.core_type = #tpu.core_type<tc>, window_params = [{transform_indices = @transform_0, window_bounds = array<i64: 1>}, {transform_indices = @transform_1, window_bounds = array<i64: 2>}, {transform_indices = @transform_2, window_bounds = array<i64: 8, 128>}, {transform_indices = @transform_3, window_bounds = array<i64: 8, 128>}]} {
    %c0 = arith.constant 0 : index
    %0 = memref.load %arg1[%c0] : memref<1xi32, #tpu.memory_space<smem>>
    %c-1640531527_i32 = arith.constant -1640531527 : i32
    %1 = arith.muli %arg0, %c-1640531527_i32 : i32
    %2 = arith.xori %0, %1 : i32
    %c-1640531527_i32_0 = arith.constant -1640531527 : i32
    %3 = arith.addi %2, %c-1640531527_i32_0 : i32
    %c16_i32 = arith.constant 16 : i32
    %4 = arith.shrui %3, %c16_i32 : i32
    %5 = arith.xori %3, %4 : i32
    %c569420461_i32 = arith.constant 569420461 : i32
    %6 = arith.muli %5, %c569420461_i32 : i32
    %c15_i32 = arith.constant 15 : i32
    %7 = arith.shrui %6, %c15_i32 : i32
    %8 = arith.xori %6, %7 : i32
    %c1935289751_i32 = arith.constant 1935289751 : i32
    %9 = arith.muli %8, %c1935289751_i32 : i32
    %c15_i32_1 = arith.constant 15 : i32
    %10 = arith.shrui %9, %c15_i32_1 : i32
    %11 = arith.xori %9, %10 : i32
    %12 = tpu.iota {dimensions = array<i32: 0>} : vector<8x128xi32>
    %13 = tpu.iota {dimensions = array<i32: 1>} : vector<8x128xi32>
    %c128_i32 = arith.constant 128 : i32
    %14 = vector.broadcast %c128_i32 : i32 to vector<8x128xi32>
    %15 = arith.muli %12, %14 : vector<8x128xi32>
    %16 = arith.addi %15, %13 : vector<8x128xi32>
    %c2_i32 = arith.constant 2 : i32
    %17 = vector.broadcast %c2_i32 : i32 to vector<8x128xi32>
    %18 = arith.muli %16, %17 : vector<8x128xi32>
    %19 = vector.broadcast %11 : i32 to vector<8x128xi32>
    %20 = arith.addi %19, %18 : vector<8x128xi32>
    %c-1640531527_i32_2 = arith.constant -1640531527 : i32
    %21 = vector.broadcast %c-1640531527_i32_2 : i32 to vector<8x128xi32>
    %22 = arith.addi %20, %21 : vector<8x128xi32>
    %c16_i32_3 = arith.constant 16 : i32
    %23 = vector.broadcast %c16_i32_3 : i32 to vector<8x128xi32>
    %24 = arith.shrui %22, %23 : vector<8x128xi32>
    %25 = arith.xori %22, %24 : vector<8x128xi32>
    %c569420461_i32_4 = arith.constant 569420461 : i32
    %26 = vector.broadcast %c569420461_i32_4 : i32 to vector<8x128xi32>
    %27 = arith.muli %25, %26 : vector<8x128xi32>
    %c15_i32_5 = arith.constant 15 : i32
    %28 = vector.broadcast %c15_i32_5 : i32 to vector<8x128xi32>
    %29 = arith.shrui %27, %28 : vector<8x128xi32>
    %30 = arith.xori %27, %29 : vector<8x128xi32>
    %c1935289751_i32_6 = arith.constant 1935289751 : i32
    %31 = vector.broadcast %c1935289751_i32_6 : i32 to vector<8x128xi32>
    %32 = arith.muli %30, %31 : vector<8x128xi32>
    %c15_i32_7 = arith.constant 15 : i32
    %33 = vector.broadcast %c15_i32_7 : i32 to vector<8x128xi32>
    %34 = arith.shrui %32, %33 : vector<8x128xi32>
    %35 = arith.xori %32, %34 : vector<8x128xi32>
    %c1_i32 = arith.constant 1 : i32
    %36 = vector.broadcast %c1_i32 : i32 to vector<8x128xi32>
    %37 = arith.addi %20, %36 : vector<8x128xi32>
    %c-1640531527_i32_8 = arith.constant -1640531527 : i32
    %38 = vector.broadcast %c-1640531527_i32_8 : i32 to vector<8x128xi32>
    %39 = arith.addi %37, %38 : vector<8x128xi32>
    %c16_i32_9 = arith.constant 16 : i32
    %40 = vector.broadcast %c16_i32_9 : i32 to vector<8x128xi32>
    %41 = arith.shrui %39, %40 : vector<8x128xi32>
    %42 = arith.xori %39, %41 : vector<8x128xi32>
    %c569420461_i32_10 = arith.constant 569420461 : i32
    %43 = vector.broadcast %c569420461_i32_10 : i32 to vector<8x128xi32>
    %44 = arith.muli %42, %43 : vector<8x128xi32>
    %c15_i32_11 = arith.constant 15 : i32
    %45 = vector.broadcast %c15_i32_11 : i32 to vector<8x128xi32>
    %46 = arith.shrui %44, %45 : vector<8x128xi32>
    %47 = arith.xori %44, %46 : vector<8x128xi32>
    %c1935289751_i32_12 = arith.constant 1935289751 : i32
    %48 = vector.broadcast %c1935289751_i32_12 : i32 to vector<8x128xi32>
    %49 = arith.muli %47, %48 : vector<8x128xi32>
    %c15_i32_13 = arith.constant 15 : i32
    %50 = vector.broadcast %c15_i32_13 : i32 to vector<8x128xi32>
    %51 = arith.shrui %49, %50 : vector<8x128xi32>
    %52 = arith.xori %49, %51 : vector<8x128xi32>
    %c8_i32 = arith.constant 8 : i32
    %53 = vector.broadcast %c8_i32 : i32 to vector<8x128xi32>
    %54 = arith.shrui %35, %53 : vector<8x128xi32>
    %55 = arith.uitofp %54 : vector<8x128xi32> to vector<8x128xf32>
    %cst = arith.constant 1.000000e+00 : f32
    %56 = vector.broadcast %cst : f32 to vector<8x128xf32>
    %57 = arith.addf %55, %56 : vector<8x128xf32>
    %cst_14 = arith.constant 5.96046448E-8 : f32
    %58 = vector.broadcast %cst_14 : f32 to vector<8x128xf32>
    %59 = arith.mulf %57, %58 : vector<8x128xf32>
    %c8_i32_15 = arith.constant 8 : i32
    %60 = vector.broadcast %c8_i32_15 : i32 to vector<8x128xi32>
    %61 = arith.shrui %52, %60 : vector<8x128xi32>
    %62 = arith.uitofp %61 : vector<8x128xi32> to vector<8x128xf32>
    %cst_16 = arith.constant 5.96046448E-8 : f32
    %63 = vector.broadcast %cst_16 : f32 to vector<8x128xf32>
    %64 = arith.mulf %62, %63 : vector<8x128xf32>
    %65 = math.log %59 : vector<8x128xf32>
    %cst_17 = arith.constant -2.000000e+00 : f32
    %66 = vector.broadcast %cst_17 : f32 to vector<8x128xf32>
    %67 = arith.mulf %66, %65 : vector<8x128xf32>
    %68 = math.sqrt %67 : vector<8x128xf32>
    %cst_18 = arith.constant 6.28318548 : f32
    %69 = vector.broadcast %cst_18 : f32 to vector<8x128xf32>
    %70 = arith.mulf %69, %64 : vector<8x128xf32>
    %71 = math.cos %70 : vector<8x128xf32>
    %72 = arith.mulf %68, %71 : vector<8x128xf32>
    %c1 = arith.constant 1 : index
    %73 = memref.load %arg2[%c1] : memref<2xf32, #tpu.memory_space<smem>>
    %c0_19 = arith.constant 0 : index
    %74 = memref.load %arg2[%c0_19] : memref<2xf32, #tpu.memory_space<smem>>
    %75 = vector.broadcast %74 : f32 to vector<8x128xf32>
    %76 = arith.mulf %75, %72 : vector<8x128xf32>
    %77 = vector.broadcast %73 : f32 to vector<8x128xf32>
    %78 = arith.addf %77, %76 : vector<8x128xf32>
    %c0_20 = arith.constant 0 : index
    %c0_21 = arith.constant 0 : index
    %79 = vector.load %arg3[%c0_20, %c0_21] : memref<8x128xf32, #tpu.memory_space<vmem>>, vector<8x128xf32>
    %80 = arith.addf %79, %78 : vector<8x128xf32>
    %c0_22 = arith.constant 0 : index
    %c0_23 = arith.constant 0 : index
    %81 = vector.load %arg4[%c0_22, %c0_23] : memref<8x128xf32, #tpu.memory_space<vmem>>, vector<8x128xf32>
    tpu.vector_store %arg4[%c0_22, %c0_23], %80 {strides = array<i32>} : memref<8x128xf32, #tpu.memory_space<vmem>>, vector<8x128xf32>,
    return
  }
  func.func @transform_0(%arg0: i32) -> i32 {
    %c0_i32 = arith.constant 0 : i32
    %c0_i32_0 = arith.constant 0 : i32
    return %c0_i32 : i32
  }
  func.func @transform_1(%arg0: i32) -> i32 {
    %c0_i32 = arith.constant 0 : i32
    %c0_i32_0 = arith.constant 0 : i32
    return %c0_i32 : i32
  }
  func.func @transform_2(%arg0: i32) -> (i32, i32) {
    %c0_i32 = arith.constant 0 : i32
    %c0_i32_0 = arith.constant 0 : i32
    return %arg0, %c0_i32 : i32, i32
  }
  func.func @transform_3(%arg0: i32) -> (i32, i32) {
    %c0_i32 = arith.constant 0 : i32
    %c0_i32_0 = arith.constant 0 : i32
    return %arg0, %c0_i32 : i32, i32
  }
}

</mosaic_0001>

<llo_original>
// kernel: tpu_custom_call.1
$region0: #{tpu_custom_call.1}
  #allocation0 [shape = 'u32[]', space=smem, size = 0x4, offset = 0x4, fixed_abs, tag = 'smem constant byte address 0x4 - core index']
  #allocation1 [shape = 'u32[144,128]{1,0:T(1,128)}', space=vmem, size = 0x12000, scoped, tag = 'internal scratch']
  #allocation2 [shape = 's32[1]{0:T(128)S(6)}', space=smem, size = 0x200, scoped, tag = 'scoped memory for tpu_custom_call.1']
  %s0 = inlined_call_operand.<no memory space> [shape: s32[1], index: 0, kind: input, shape index: {}]
  %s1 = inlined_call_operand.vmem [shape: f32[2], index: 1, kind: input, shape index: {}]
  %s2 = inlined_call_operand.hbm [shape: f32[16,128], index: 2, kind: input, shape index: {}]
  %s3 = inlined_call_operand.hbm [shape: f32[16,128], index: 3, kind: output, shape index: {}]
  %s4 = sld [smem:[#allocation0]]
  $region53: #{tpu_custom_call.1} parent=0
    _
  %s6 = ssub.s32 1, %s4
  %s7 = scalar_select 0, %s6, %s4
  %8 = sst [smem:[#allocation2]] %s0
  $region1: #{tpu_custom_call.1} parent=0
    #allocation3 [shape = 'u8[512]{0}', space=smem, size = 0x200, scoped, tag = 'input window, operand 1, single buffered']
    #allocation4 [shape = 's32[2]{0}', space=sflag, size = 0x8, scoped, tag = 'scoped memory for tpu_custom_call.1']
    #allocation5 [shape = 's32[2]{0}', space=sflag, size = 0x8, scoped, tag = 'scoped memory for tpu_custom_call.1']
    #allocation6 [shape = 's32[2]{0}', space=sflag, size = 0x8, scoped, tag = 'scoped memory for tpu_custom_call.1']
    #allocation7 [shape = 'u8[8192]{0}', space=vmem, size = 0x2000, scoped, tag = 'input window, operand 2']
    #allocation8 [shape = 'u8[8192]{0}', space=vmem, size = 0x2000, scoped, tag = 'output window, operand 0']
    %9 = vsyncpa [#allocation6], 0
    %10 = vsyncpa [#allocation4], 0
    %s11 = scalar_lea.sflag [#allocation4], 1
    %12 = vsyncpa %s11, 0
    %13 = vsyncpa [#allocation5], 0
    %s14 = scalar_lea.sflag [#allocation5], 1
    %15 = vsyncpa %s14, 0
    loop: start=0, step=1, limit=4
    $region2: #{tpu_custom_call.1} parent=1 // loop_pre_header
      _
    $region3: #{tpu_custom_call.1} parent=1 // loop_header
      %s17 = sphi 0, %s21
      %p18 = scmp.ge.s32.totalorder %s17, 4
      %s25 = sphi 0, %s25
      %s27 = sphi 0, %s25
      %s28 = sphi 0, %s27
      %s42 = sphi 0, %s28
      %s46 = sphi 0, %s46
      %s48 = sphi 0, %s46
      %s49 = sphi 0, %s48
      %s63 = sphi 0, %s49
      %s69 = sphi 0, %s71
      %s72 = sphi 0, %s69
      %s73 = sphi 0, %s72
      %s89 = sphi 0, %s73
      %s95 = sphi 0, %s97
      %s98 = sphi 0, %s95
      %s99 = sphi 0, %s98
      %s115 = sphi 0, %s99
    $region4: #{tpu_custom_call.1} parent=1 // loop_header_branch
      %20 = sbr.rel (%p18) target = $region8
    $region5: #{tpu_custom_call.1} parent=1 // loop_body
      %s22 = ssub.s32 %s17, 1
      %s23 = ssub.s32 %s17, 2
      %s24 = sadd.s32 %s17, 1
      %s26 = sadd.s32 %s25, 1
      %p29 = scmp.eq.s32.totalorder %s17, 1
      %p30 = scmp.ne.s32.totalorder %s25, %s27
      %p31 = scmp.eq.s32.totalorder %s17, 0
      %p32 = por %p30, %p31
      %p33 = scmp.ne.s32.totalorder %s25, %s27
      %p34 = scmp.eq.s32.totalorder %s22, 1
      %p35 = por %p33, %p34
      %p36 = scmp.ne.s32.totalorder %s27, %s28
      %p37 = scmp.eq.s32.totalorder %s22, 0
      %p38 = por %p36, %p37
      %p39 = scmp.ne.s32.totalorder %s27, %s28
      %p40 = scmp.eq.s32.totalorder %s23, 1
      %p41 = por %p39, %p40
      %p43 = scmp.ne.s32.totalorder %s28, %s42
      %p44 = scmp.eq.s32.totalorder %s23, 0
      %p45 = por %p43, %p44
      %s47 = sadd.s32 %s46, 1
      %p50 = scmp.eq.s32.totalorder %s17, 1
      %p51 = scmp.ne.s32.totalorder %s46, %s48
      %p52 = scmp.eq.s32.totalorder %s17, 0
      %p53 = por %p51, %p52
      %p54 = scmp.ne.s32.totalorder %s46, %s48
      %p55 = scmp.eq.s32.totalorder %s22, 1
      %p56 = por %p54, %p55
      %p57 = scmp.ne.s32.totalorder %s48, %s49
      %p58 = scmp.eq.s32.totalorder %s22, 0
      %p59 = por %p57, %p58
      %p60 = scmp.ne.s32.totalorder %s48, %s49
      %p61 = scmp.eq.s32.totalorder %s23, 1
      %p62 = por %p60, %p61
      %p64 = scmp.ne.s32.totalorder %s49, %s63
      %p65 = scmp.eq.s32.totalorder %s23, 0
      %p66 = por %p64, %p65
      %s67 = ssub.s32 %s17, %s24
      %p68 = scmp.eq.s32.totalorder %s67, 0
      %s70 = sadd.s32 %s69, 1
      %s71 = scalar_select %p68, %s69, %s70
      %p74 = pneg %p68
      %p75 = scmp.eq.s32.totalorder %s17, 1
      %p76 = por %p74, %p75
      %p77 = scmp.ne.s32.totalorder %s69, %s72
      %p78 = scmp.eq.s32.totalorder %s17, 0
      %p79 = por %p77, %p78
      %p80 = scmp.ne.s32.totalorder %s69, %s72
      %p81 = scmp.eq.s32.totalorder %s22, 1
      %p82 = por %p80, %p81
      %p83 = scmp.ne.s32.totalorder %s72, %s73
      %p84 = scmp.eq.s32.totalorder %s22, 0
      %p85 = por %p83, %p84
      %p86 = scmp.ne.s32.totalorder %s72, %s73
      %p87 = scmp.eq.s32.totalorder %s23, 1
      %p88 = por %p86, %p87
      %p90 = scmp.ne.s32.totalorder %s73, %s89
      %p91 = scmp.eq.s32.totalorder %s23, 0
      %p92 = por %p90, %p91
      %s93 = ssub.s32 %s17, %s24
      %p94 = scmp.eq.s32.totalorder %s93, 0
      %s96 = sadd.s32 %s95, 1
      %s97 = scalar_select %p94, %s95, %s96
      %p100 = pneg %p94
      %p101 = scmp.eq.s32.totalorder %s17, 1
      %p102 = por %p100, %p101
      %p103 = scmp.ne.s32.totalorder %s95, %s98
      %p104 = scmp.eq.s32.totalorder %s17, 0
      %p105 = por %p103, %p104
      %p106 = scmp.ne.s32.totalorder %s95, %s98
      %p107 = scmp.eq.s32.totalorder %s22, 1
      %p108 = por %p106, %p107
      %p109 = scmp.ne.s32.totalorder %s98, %s99
      %p110 = scmp.eq.s32.totalorder %s22, 0
      %p111 = por %p109, %p110
      %p112 = scmp.ne.s32.totalorder %s98, %s99
      %p113 = scmp.eq.s32.totalorder %s23, 1
      %p114 = por %p112, %p113
      %p116 = scmp.ne.s32.totalorder %s99, %s115
      %p117 = scmp.eq.s32.totalorder %s23, 0
      %p118 = por %p116, %p117
      %p119 = scmp.le.s32.totalorder 1, %s17
      %p120 = scmp.lt.s32.totalorder %s17, 3
      %p121 = pnand %p119, %p120
      %p122 = pneg %p121
      // Predicated region
      $region9: #{tpu_custom_call.1} parent=5 // pred_check
        _
      $region10: #{tpu_custom_call.1} parent=5 // pred_check_branch
        %124 = sbr.rel (%p121) target = $region12
      $region11: #{tpu_custom_call.1} parent=5 // pred_region
        %s125 = ssub.s32 %s17, 1
        // Predicated region
        $region13: #{tpu_custom_call.1} parent=11 // pred_check
          %p126 = pneg %p38
        $region14: #{tpu_custom_call.1} parent=11 // pred_check_branch
          %128 = sbr.rel (%p126) target = $region16
        $region15: #{tpu_custom_call.1} parent=11 // pred_region
          _
        $region16: #{tpu_custom_call.1} parent=11 // pred_fallthru
          _
        // Predicated region
        $region17: #{tpu_custom_call.1} parent=11 // pred_check
          %p129 = pneg %p59
        $region18: #{tpu_custom_call.1} parent=11 // pred_check_branch
          %131 = sbr.rel (%p129) target = $region20
        $region19: #{tpu_custom_call.1} parent=11 // pred_region
          %s133 = ssub.s32 16, 16
          %134 = vsyncadd [#allocation6], %s133
          %s136 = sshll.u32 %s1, 4
          %s137 = int_to_ptr.vmem [resolvable:$true] %s136
          %139 = dma.vmem_to_smem %s137, 16, [#allocation3], [#allocation6]
        $region20: #{tpu_custom_call.1} parent=11 // pred_fallthru
          _
      $region12: #{tpu_custom_call.1} parent=5 // pred_fallthru
        _
      %p140 = scmp.lt.s32.totalorder %s17, 2
      // Predicated region
      $region21: #{tpu_custom_call.1} parent=5 // pred_check
        %p141 = pneg %p140
      $region22: #{tpu_custom_call.1} parent=5 // pred_check_branch
        %143 = sbr.rel (%p141) target = $region24
      $region23: #{tpu_custom_call.1} parent=5 // pred_region
        // Predicated region
        $region25: #{tpu_custom_call.1} parent=23 // pred_check
          %p144 = pneg %p79
        $region26: #{tpu_custom_call.1} parent=23 // pred_check_branch
          %146 = sbr.rel (%p144) target = $region28
        $region27: #{tpu_custom_call.1} parent=23 // pred_region
          %s147 = sand.u32 %s69, 1
          %s148 = scalar_lea.sflag [#allocation4], %s147
          %s149 = sand.u32 %s69, 1
          %s150 = smul.addr %s149, 8
          %s151 = scalar_lea.vmem [#allocation7], %s150
          %s153 = ssub.s32 128, 128
          %154 = vsyncadd %s148, %s153
          %s155 = smul.addr %s17, 128
          %s156 = scalar_lea.hbm %s2, %s155
          %s158 = sshll.u32 %s151, 4
          %s159 = int_to_ptr.vmem [resolvable:$true] %s158
          %161 = dma.hbm_to_vmem [thread:$0]  %s156, 128, %s159, %s148
        $region28: #{tpu_custom_call.1} parent=23 // pred_fallthru
          _
      $region24: #{tpu_custom_call.1} parent=5 // pred_fallthru
        _
      %p162 = scmp.le.s32.totalorder 1, %s17
      %p163 = scmp.lt.s32.totalorder %s17, 3
      %p164 = pnand %p162, %p163
      %p165 = pneg %p164
      // Predicated region
      $region29: #{tpu_custom_call.1} parent=5 // pred_check
        _
      $region30: #{tpu_custom_call.1} parent=5 // pred_check_branch
        %167 = sbr.rel (%p164) target = $region32
      $region31: #{tpu_custom_call.1} parent=5 // pred_region
        %s168 = ssub.s32 %s17, 1
        // Predicated region
        $region33: #{tpu_custom_call.1} parent=31 // pred_check
          %p169 = pneg %p59
        $region34: #{tpu_custom_call.1} parent=31 // pred_check_branch
          %171 = sbr.rel (%p169) target = $region36
        $region35: #{tpu_custom_call.1} parent=31 // pred_region
          %172 = dma.done [#allocation6], 16
        $region36: #{tpu_custom_call.1} parent=31 // pred_fallthru
          _
        %s173 = sand.u32 %s72, 1
        %s174 = scalar_lea.sflag [#allocation4], %s173
        %s175 = sand.u32 %s72, 1
        %s176 = smul.addr %s175, 8
        %s177 = scalar_lea.vmem [#allocation7], %s176
        // Predicated region
        $region37: #{tpu_custom_call.1} parent=31 // pred_check
          %p178 = pneg %p85
        $region38: #{tpu_custom_call.1} parent=31 // pred_check_branch
          %180 = sbr.rel (%p178) target = $region40
        $region39: #{tpu_custom_call.1} parent=31 // pred_region
          %181 = dma.done %s174, 128
        $region40: #{tpu_custom_call.1} parent=31 // pred_fallthru
          _
        %182 = sfence
        %p183 = pneg %p38
        %p184 = pneg %p35
        %p185 = pneg %p59
        %p186 = pneg %p56
        %s187 = sand.u32 %s72, 1
        %s188 = scalar_lea.sflag [#allocation4], %s187
        %s189 = sand.u32 %s72, 1
        %s190 = smul.addr %s189, 8
        %s191 = scalar_lea.vmem [#allocation7], %s190
        %p192 = pneg %p85
        %p193 = pneg %p82
        %p194 = pneg %p111
        %p195 = pneg %p108
        %s196 = sand.u32 %s98, 1
        %s197 = scalar_lea.sflag [#allocation5], %s196
        %s198 = sand.u32 %s98, 1
        %s199 = smul.addr %s198, 8
        %s200 = scalar_lea.vmem [#allocation8], %s199
        %s201 = sld [smem:[#allocation2]]
        %s202 = smul.u32 %s22, 2654435769
        %s203 = sxor.u32 %s201, %s202
        %s204 = sadd.s32 %s203, 2654435769
        %s205 = sshrl.u32 %s204, 16
        %s206 = sxor.u32 %s204, %s205
        %s207 = smul.u32 %s206, 569420461
        %s208 = sshrl.u32 %s207, 15
        %s209 = sxor.u32 %s207, %s208
        %s210 = smul.u32 %s209, 1935289751
        %s211 = sshrl.u32 %s210, 15
        %s212 = sxor.u32 %s210, %s211
        %v213 = vlaneseq
        %v214 = vshrl.u32 %v213, 7
        %v215 = vlaneseq
        %v216 = vand.u32 %v215, 127
        %v217 = vmul.u32 %v214, 128
        %v218 = vadd.s32 %v217, %v216
        %v219 = vmul.u32 %v218, 2
        %v220 = vstv %s212
        %v221 = vadd.s32 %v220, %v219
        %v222 = vadd.s32 %v221, 2654435769
        %v223 = vshrl.u32 %v222, 16
        %v224 = vxor.u32 %v222, %v223
        %v225 = vmul.u32 %v224, 569420461
        %v226 = vshrl.u32 %v225, 15
        %v227 = vxor.u32 %v225, %v226
        %v228 = vmul.u32 %v227, 1935289751
        %v229 = vshrl.u32 %v228, 15
        %v230 = vxor.u32 %v228, %v229
        %v231 = vadd.s32 %v221, 1
        %v232 = vadd.s32 %v231, 2654435769
        %v233 = vshrl.u32 %v232, 16
        %v234 = vxor.u32 %v232, %v233
        %v235 = vmul.u32 %v234, 569420461
        %v236 = vshrl.u32 %v235, 15
        %v237 = vxor.u32 %v235, %v236
        %v238 = vmul.u32 %v237, 1935289751
        %v239 = vshrl.u32 %v238, 15
        %v240 = vxor.u32 %v238, %v239
        %v241 = vshrl.u32 %v230, 8
        %v242 = vshrl.u32 %v241, 16
        %v243 = vand.u32 %v241, 65535
        %v244 = vcvt.s32.f32 %v242
        %v245 = vmul.f32 %v244, 65536.0
        %v246 = vcvt.s32.f32 %v243
        %v247 = vadd.f32 %v245, %v246
        %v248 = vadd.f32 %v247, 1.0
        %v249 = vmul.f32 %v248, 5.9604645e-08
        %v250 = vshrl.u32 %v240, 8
        %v251 = vshrl.u32 %v250, 16
        %v252 = vand.u32 %v250, 65535
        %v253 = vcvt.s32.f32 %v251
        %v254 = vmul.f32 %v253, 65536.0
        %v255 = vcvt.s32.f32 %v252
        %v256 = vadd.f32 %v254, %v255
        %v257 = vmul.f32 %v256, 5.9604645e-08
        %v258 = vlog2.pop %v249
        %v259 = vmul.f32 %v258, 0.6931472
        %v260 = vmul.f32 %v259, -2.0
        %v261 = vrsqrt.pop %v260
        %v262 = vmul.f32 %v260, %v261
        %vm263 = vcmp.eq.f32.partialorder %v260, inf
        %v264 = vsel %vm263, %v260, %v262
        %vm265 = vcmp.eq.f32.partialorder %v260, 0.0
        %v266 = vand.u32 %v260, 2147483648
        %v267 = vsel %vm265, %v266, %v264
        %v268 = vmul.f32 %v257, 6.2831855
        %v269 = vand.u32 2147483647, %v268
        %vm270 = vcmp.le.f32.partialorder %v269, 0.7853982
        %vm271 = vcmp.lt.s32.totalorder %v268, 0
        %v272 = vand.u32 %v268, 2139095040
        %v273 = vshrl.u32 %v272, 23
        %v274 = vsub.s32 %v273, 127
        %v275 = vand.u32 2147483647, %v268
        %v276 = vand.u32 %v275, 8388607
        %v277 = vor.u32 %v276, 8388608
        %v278 = vsub.s32 0, %v277
        %v279 = vadd.s32 %v274, 1
        %vm280 = vcmp.gt.s32.totalorder %v279, 0
        %v281 = vsel %vm280, %v279, 0
        %v282 = vshrl.u32 %v281, 5
        %v283 = vand.u32 %v281, 31
        %v284 = vsub.s32 32, %v283
        %v285 = vshrl.u32 683565275, %v284
        %v286 = vshll.u32 683565275, %v283
        %v287 = vshrl.u32 2475754826, %v284
        %v288 = vor.u32 %v286, %v287
        %v289 = vshll.u32 2475754826, %v283
        %v290 = vshrl.u32 2131351028, %v284
        %v291 = vor.u32 %v289, %v290
        %v292 = vshll.u32 2131351028, %v283
        %v293 = vshrl.u32 2102212464, %v284
        %v294 = vor.u32 %v292, %v293
        %v295 = vshll.u32 2102212464, %v283
        %v296 = vshrl.u32 920167782, %v284
        %v297 = vor.u32 %v295, %v296
        %v298 = vshll.u32 920167782, %v283
        %v299 = vshrl.u32 1326507024, %v284
        %v300 = vor.u32 %v298, %v299
        %vm301 = vcmp.lt.s32.totalorder %v282, 1
        %vm302 = vcmp.lt.s32.totalorder %v282, 2
        %vm303 = vcmp.lt.s32.totalorder %v282, 3
        %vm304 = vcmp.lt.s32.totalorder %v282, 4
        %v305 = vsel %vm301, %v285, %v288
        %v306 = vsel %vm304, %v294, 2102212464
        %v307 = vsel %vm303, %v291, %v306
        %v308 = vsel %vm302, %v305, %v307
        %v309 = vsel %vm301, %v288, %v291
        %v310 = vsel %vm304, %v297, 920167782
        %v311 = vsel %vm303, %v294, %v310
        %v312 = vsel %vm302, %v309, %v311
        %v313 = vsel %vm301, %v291, %v294
        %v314 = vsel %vm304, %v300, 1326507024
        %v315 = vsel %vm303, %v297, %v314
        %v316 = vsel %vm302, %v313, %v315
        %v317 = vshll.u32 %v277, 8
        %v318 = vmul.u32.u64.compose %v317, %v316
        %v319 = vextract.low.u32 %v318
        %v320 = vextract.high.u32 %v318
        %v321 = vmul.u32.u64.compose %v317, %v312
        %v322 = vextract.low.u32 %v321
        %v323 = vextract.high.u32 %v321
        %v324 = vmul.u32 %v317, %v308
        %v325 = vadd.s32 %v320, %v322
        %vm326 = vc.u32 %v320, %v322
        %v327 = vadd.s32 %v323, 1
        %v328 = vsel %vm326, %v327, %v323
        %v329 = vadd.s32 %v324, %v328
        %v330 = vadd.s32 %v329, 536870912
        %v331 = vshrl.u32 %v330, 30
        %v332 = vshll.u32 %v331, 30
        %v333 = vsub.s32 %v329, %v332
        %vm334 = vcmp.lt.s32.totalorder %v333, 0
        %v335 = vsub.s32 0, %v333
        %v336 = vsel %vm334, %v335, %v333
        %v337 = vclz %v336
        %v338 = vsub.s32 %v337, 2
        %vm339 = vcmp.gt.s32.totalorder 0, %v338
        %v340 = vsel %vm339, 0, %v338
        %v341 = vsub.s32 32, %v340
        %v342 = vshll.u32 %v333, %v340
        %v343 = vshrl.u32 %v325, %v341
        %v344 = vor.u32 %v342, %v343
        %v345 = vsub.s32 4294967266, %v340
        %v346 = vadd.s32 %v345, 127
        %v347 = vshll.u32 %v346, 23
        %v348 = vor.u32 4788187, %v347
        %v349 = vand.u32 2147483647, %v348
        %v351 = vcvt.s32.f32 %v344
        %v352 = vmul.f32 %v351, %v349
        %v353 = vxor.u32 %v352, 2147483648
        %v354 = vsel %vm271, %v353, %v352
        %v355 = vsub.s32 4, %v331
        %v356 = vsel %vm271, %v355, %v331
        %v357 = vsel %vm270, %v268, %v354
        %v358 = vsel %vm270, 0, %v356
        %v359 = vcosq.f32.pop %v357
        %v360 = vsinq.f32.pop %v357
        %vm361 = vweird.f32 %v268
        %v362 = vand.u32 %v358, 3
        %vm363 = vcmp.lt.s32.totalorder %v362, 2
        %vm364 = vcmp.eq.s32.totalorder %v362, 0
        %v365 = vxor.u32 %v360, 2147483648
        %v366 = vsel %vm364, %v359, %v365
        %vm367 = vcmp.eq.s32.totalorder %v362, 2
        %v368 = vxor.u32 %v359, 2147483648
        %v369 = vsel %vm367, %v368, %v360
        %v370 = vsel %vm363, %v366, %v369
        %v371 = vsel %vm361, nan, %v370
        %v372 = vmul.f32 %v267, %v371
        %s373 = sld [smem:[#allocation3 + $0x1]]
        %s374 = sld [smem:[#allocation3]]
        %v375 = vstv %s374
        %v376 = vmul.f32 %v375, %v372
        %v377 = vstv %s373
        %v378 = vadd.f32 %v377, %v376
        %v379 = vld [vmem:[%s177] sm:$0xff]
        %v380 = vadd.f32 %v379, %v378
        %381 = vst [vmem:[%s200] sm:$0xff] %v380
        %s382 = sand.u32 %s98, 1
        %s383 = scalar_lea.sflag [#allocation5], %s382
        %s384 = sand.u32 %s98, 1
        %s385 = smul.addr %s384, 8
        %s386 = scalar_lea.vmem [#allocation8], %s385
        // Predicated region
        $region41: #{tpu_custom_call.1} parent=31 // pred_check
          %p387 = pneg %p108
        $region42: #{tpu_custom_call.1} parent=31 // pred_check_branch
          %389 = sbr.rel (%p387) target = $region44
        $region43: #{tpu_custom_call.1} parent=31 // pred_region
          %s391 = ssub.s32 128, 128
          %392 = vsyncadd %s383, %s391
          %s393 = smul.addr %s22, 128
          %s394 = scalar_lea.hbm %s3, %s393
          %s396 = sshll.u32 %s386, 4
          %s397 = int_to_ptr.vmem [resolvable:$true] %s396
          %399 = dma.vmem_to_hbm [thread:$0]  %s397, 128, %s394, %s383
        $region44: #{tpu_custom_call.1} parent=31 // pred_fallthru
          _
      $region32: #{tpu_custom_call.1} parent=5 // pred_fallthru
        _
      %p400 = scmp.le.s32.totalorder 2, %s17
      // Predicated region
      $region45: #{tpu_custom_call.1} parent=5 // pred_check
        %p401 = pneg %p400
      $region46: #{tpu_custom_call.1} parent=5 // pred_check_branch
        %403 = sbr.rel (%p401) target = $region48
      $region47: #{tpu_custom_call.1} parent=5 // pred_region
        %s404 = ssub.s32 %s17, 2
        // Predicated region
        $region49: #{tpu_custom_call.1} parent=47 // pred_check
          %p405 = pneg %p114
        $region50: #{tpu_custom_call.1} parent=47 // pred_check_branch
          %407 = sbr.rel (%p405) target = $region52
        $region51: #{tpu_custom_call.1} parent=47 // pred_region
          %s408 = sand.u32 %s99, 1
          %s409 = scalar_lea.sflag [#allocation5], %s408
          %s410 = sand.u32 %s99, 1
          %s411 = smul.addr %s410, 8
          %s412 = scalar_lea.vmem [#allocation8], %s411
          %413 = dma.done %s409, 128
        $region52: #{tpu_custom_call.1} parent=47 // pred_fallthru
          _
      $region48: #{tpu_custom_call.1} parent=5 // pred_fallthru
        _
    $region6: #{tpu_custom_call.1} parent=1 // loop_footer
      %s21 = sadd.s32 1, %s17
    $region7: #{tpu_custom_call.1} parent=1 // loop_footer_branch
      %16 = sbr.rel target = $region3
    $region8: #{tpu_custom_call.1} parent=1 // loop_exit
      _
    %414 = vsyncpa [#allocation4], 1
    %s415 = scalar_lea.sflag [#allocation4], 1
    %416 = vsyncpa %s415, 1
    %417 = vsyncpa [#allocation5], 1
    %s418 = scalar_lea.sflag [#allocation5], 1
    %419 = vsyncpa %s418, 1
    %420 = vsyncpa [#allocation6], 1
    %s421 = scalar_lea.sflag [#allocation6], 1
    %422 = vsyncpa %s421, 1

</llo_original>
